<compile_context>
chip_gen: v6e
topology: v6e:2x2x1
jax: 0.10.0
libtpu: 0.0.40
codegen_flags: <defaults>
</compile_context>

<pallas_src>
import functools
import math

import jax
import jax.numpy as jnp
from jax.experimental import pallas as pl
from jax.experimental.pallas import tpu as pltpu


def _layernorm_kernel(x_ref, alpha_ref, bias_ref, o_ref, *, eps, d_model,
                      bf16_epilogue):
    # x_ref: (rows_tile, d_model); alpha_ref / bias_ref: (1, d_model).
    x = x_ref[...].astype(jnp.float32)

    inv_d = jnp.float32(1.0 / d_model)
    # Bessel's correction (torch.Tensor.std divides by N-1).  d_model == 1 is
    # guarded against div-by-zero; torch itself would return NaN there.
    inv_dm1 = jnp.float32(1.0 / max(d_model - 1, 1))

    # Row-wise mean: one XLU reduce, scale by a constant instead of dividing.
    mean = jnp.sum(x, axis=-1, keepdims=True) * inv_d
    centered = x - mean

    # Unbiased variance, matching torch.Tensor.std().
    # TODO(synk): if a bundle dump shows the XLU reduce slot saturating on
    # v6e/v7x bf16, offload both row reductions to the idle MXU via a
    # jnp.dot(tile, ones) column reduce (verify f32 accumulation-order parity).
    var_unbiased = jnp.sum(centered * centered, axis=-1, keepdims=True) * inv_dm1
    std = jnp.sqrt(var_unbiased)

    # One EUP reciprocal per ROW ((rows_tile, 1)) + a VPU multiply over the tile
    # instead of a full-width divide.
    inv = pl.reciprocal(std + jnp.float32(eps), approx=False)
    normed = centered * inv

    if bf16_epilogue:
        # Packed bf16 VALU for the scale+shift and the store (v7x win; neutral
        # elsewhere).  Only taken when x / alpha / bias / out are all bf16.
        o_ref[...] = (normed.astype(jnp.bfloat16) * alpha_ref[...]
                      + bias_ref[...])
    else:
        alpha = alpha_ref[...].astype(jnp.float32)  # (1, d) broadcasts over rows
        bias = bias_ref[...].astype(jnp.float32)
        o_ref[...] = (normed * alpha + bias).astype(o_ref.dtype)


def layer_normalization(x, alpha, bias, *, eps=1e-6, rows_per_tile=None,
                        target_block_bytes=4 << 20):
    """x: (..., d_model); alpha, bias: (d_model,). Returns same shape/dtype as x."""
    orig_shape = x.shape
    d_model = orig_shape[-1]
    rows = int(math.prod(orig_shape[:-1])) if len(orig_shape) > 1 else 1

    x2 = x.reshape(rows, d_model)
    alpha2 = alpha.reshape(1, d_model)
    bias2 = bias.reshape(1, d_model)

    itemsize = jnp.dtype(x.dtype).itemsize
    # Sublane-packing multiple for the row (second-minor) axis of the block.
    row_mult = 8 if itemsize >= 4 else (16 if itemsize == 2 else 32)

    if rows_per_tile is None:
        rpt = max(target_block_bytes // max(d_model * itemsize, 1), 1)
        rpt = min(rpt, 8192)  # review: raised from 1024 so narrow d_model still
                              # gets roofline-sized blocks
    else:
        rpt = rows_per_tile

    if rpt >= rows:
        # One block covers every row; a full-extent block dim is always legal,
        # so no rounding (and no padding) is needed.
        rpt = rows
    else:
        rpt = max((rpt // row_mult) * row_mult, row_mult)

    grid_rows = pl.cdiv(rows, rpt)
    # No jnp.pad / output slice: Pallas masks the partial last block's writes
    # and each row's result depends only on that row, so over-read rows are
    # harmless.

    block_bytes = rpt * d_model * itemsize                 # one in OR out tile
    f32_tmp_bytes = 3 * rpt * d_model * 4                  # x_f32/centered/normed
    param_bytes = d_model * (jnp.dtype(alpha.dtype).itemsize
                             + jnp.dtype(bias.dtype).itemsize)
    vmem_need = 2 * (block_bytes + block_bytes) + f32_tmp_bytes \
        + 4 * param_bytes + (2 << 20)
    # 48 MiB cap leaves headroom for Mosaic internal scratch on v7x (64 MiB
    # physical VMEM per TensorCore); v5e/v6e have 128 MiB so this is safe there
    # too, while still comfortably above their 16/32 MiB scoped defaults.
    vmem_limit = int(min(max(vmem_need, 16 << 20), 48 << 20))

    bf16_epilogue = (x.dtype == jnp.bfloat16 and alpha.dtype == jnp.bfloat16
                     and bias.dtype == jnp.bfloat16)

    # NOTE: the last block dim is the full d_model extent (valid for any
    # d_model); for best store throughput d_model should be a multiple of 128 —
    # true for real transformer widths.
    out = pl.pallas_call(
        functools.partial(_layernorm_kernel, eps=eps, d_model=d_model,
                          bf16_epilogue=bf16_epilogue),
        out_shape=jax.ShapeDtypeStruct((rows, d_model), x.dtype),
        grid_spec=pltpu.PrefetchScalarGridSpec(
            num_scalar_prefetch=0,
            grid=(grid_rows,),
            in_specs=[
                pl.BlockSpec((rpt, d_model), lambda i: (i, 0)),
                # alpha/bias are grid-invariant; their (double-buffered) VMEM
                # footprint is only a few KiB so no special pipeline_mode needed.
                pl.BlockSpec((1, d_model), lambda i: (0, 0)),
                pl.BlockSpec((1, d_model), lambda i: (0, 0)),
            ],
            out_specs=pl.BlockSpec((rpt, d_model), lambda i: (i, 0)),
        ),
        compiler_params=pltpu.CompilerParams(
            dimension_semantics=("parallel",),   # shards row grid across TCs on v7x
            vmem_limit_bytes=vmem_limit,
        ),
    )(x2, alpha2, bias2)

    return out.reshape(orig_shape)


if __name__ == "__main__":
    batch, seq, d_model = 2, 8, 32
    eps = 1e-6

    key = jax.random.PRNGKey(0)
    x = jax.random.normal(key, (batch, seq, d_model), dtype=jnp.float32)

    # Parameter init matching nn.Parameter(torch.ones/zeros(d_model)).
    alpha = jnp.ones((d_model,), dtype=jnp.float32)
    bias = jnp.zeros((d_model,), dtype=jnp.float32)

    out = layer_normalization(x, alpha, bias, eps=eps)
    out = jax.block_until_ready(out)

    # Reference in plain JAX (unbiased std, divide by std + eps).
    mean = jnp.mean(x, axis=-1, keepdims=True)
    std = jnp.sqrt(
        jnp.sum((x - mean) ** 2, axis=-1, keepdims=True) / (d_model - 1)
    )
    ref = alpha * ((x - mean) / (std + eps)) + bias
    assert jnp.allclose(out, ref, atol=1e-5, rtol=1e-5), "mismatch vs reference"

    print("KERNEL_OK")
</pallas_src>

<mosaic_0001>
module attributes {stable_mosaic.version = 11 : i64} {
  func.func @_layernorm_kernel(%arg0: i32, %arg1: memref<16x32xf32, #tpu.memory_space<vmem>>, %arg2: memref<1x32xf32, #tpu.memory_space<vmem>>, %arg3: memref<1x32xf32, #tpu.memory_space<vmem>>, %arg4: memref<16x32xf32, #tpu.memory_space<vmem>>) attributes {dimension_semantics = [#tpu.dimension_semantics<parallel>], iteration_bounds = array<i64: 1>, scalar_prefetch = 0 : i64, scratch_operands = 0 : i64, tpu.core_type = #tpu.core_type<tc>, window_params = [{transform_indices = @transform_0, window_bounds = array<i64: 16, 32>}, {pipeline_mode = #tpu.pipeline_mode<synchronous>, transform_indices = @transform_1, window_bounds = array<i64: 1, 32>}, {pipeline_mode = #tpu.pipeline_mode<synchronous>, transform_indices = @transform_2, window_bounds = array<i64: 1, 32>}, {transform_indices = @transform_3, window_bounds = array<i64: 16, 32>}]} {
    %c0 = arith.constant 0 : index
    %c0_0 = arith.constant 0 : index
    %0 = vector.load %arg1[%c0, %c0_0] : memref<16x32xf32, #tpu.memory_space<vmem>>, vector<16x32xf32>
    %cst = arith.constant dense<0.000000e+00> : vector<16xf32>
    %1 = vector.multi_reduction <add>, %0, %cst [1] : vector<16x32xf32> to vector<16xf32>
    %2 = vector.shape_cast %1 : vector<16xf32> to vector<16x1xf32>
    %cst_1 = arith.constant 3.125000e-02 : f32
    %3 = vector.broadcast %cst_1 : f32 to vector<16x1xf32>
    %4 = arith.mulf %2, %3 : vector<16x1xf32>
    %5 = vector.broadcast %4 : vector<16x1xf32> to vector<16x32xf32>
    %6 = arith.subf %0, %5 : vector<16x32xf32>
    %7 = arith.mulf %6, %6 : vector<16x32xf32>
    %cst_2 = arith.constant dense<0.000000e+00> : vector<16xf32>
    %8 = vector.multi_reduction <add>, %7, %cst_2 [1] : vector<16x32xf32> to vector<16xf32>
    %9 = vector.shape_cast %8 : vector<16xf32> to vector<16x1xf32>
    %cst_3 = arith.constant 0.0322580636 : f32
    %10 = vector.broadcast %cst_3 : f32 to vector<16x1xf32>
    %11 = arith.mulf %9, %10 : vector<16x1xf32>
    %12 = math.sqrt %11 : vector<16x1xf32>
    %cst_4 = arith.constant 9.99999997E-7 : f32
    %13 = vector.broadcast %cst_4 : f32 to vector<16x1xf32>
    %14 = arith.addf %12, %13 : vector<16x1xf32>
    %15 = tpu.reciprocal %14 : vector<16x1xf32> -> vector<16x1xf32>
    %16 = vector.broadcast %15 : vector<16x1xf32> to vector<16x32xf32>
    %17 = arith.mulf %6, %16 : vector<16x32xf32>
    %c0_5 = arith.constant 0 : index
    %c0_6 = arith.constant 0 : index
    %18 = vector.load %arg2[%c0_5, %c0_6] : memref<1x32xf32, #tpu.memory_space<vmem>>, vector<1x32xf32>
    %c0_7 = arith.constant 0 : index
    %c0_8 = arith.constant 0 : index
    %19 = vector.load %arg3[%c0_7, %c0_8] : memref<1x32xf32, #tpu.memory_space<vmem>>, vector<1x32xf32>
    %20 = vector.broadcast %18 : vector<1x32xf32> to vector<16x32xf32>
    %21 = arith.mulf %17, %20 : vector<16x32xf32>
    %22 = vector.broadcast %19 : vector<1x32xf32> to vector<16x32xf32>
    %23 = arith.addf %21, %22 : vector<16x32xf32>
    %c0_9 = arith.constant 0 : index
    %c0_10 = arith.constant 0 : index
    %24 = vector.load %arg4[%c0_9, %c0_10] : memref<16x32xf32, #tpu.memory_space<vmem>>, vector<16x32xf32>
    tpu.vector_store %arg4[%c0_9, %c0_10], %23 {strides = array<i32>} : memref<16x32xf32, #tpu.memory_space<vmem>>, vector<16x32xf32>,
    return
  }
  func.func @transform_0(%arg0: i32) -> (i32, i32) {
    %c0_i32 = arith.constant 0 : i32
    %c0_i32_0 = arith.constant 0 : i32
    return %arg0, %c0_i32 : i32, i32
  }
  func.func @transform_1(%arg0: i32) -> (i32, i32) {
    %c0_i32 = arith.constant 0 : i32
    %c0_i32_0 = arith.constant 0 : i32
    %c0_i32_1 = arith.constant 0 : i32
    return %c0_i32, %c0_i32_0 : i32, i32
  }
  func.func @transform_2(%arg0: i32) -> (i32, i32) {
    %c0_i32 = arith.constant 0 : i32
    %c0_i32_0 = arith.constant 0 : i32
    %c0_i32_1 = arith.constant 0 : i32
    return %c0_i32, %c0_i32_0 : i32, i32
  }
  func.func @transform_3(%arg0: i32) -> (i32, i32) {
    %c0_i32 = arith.constant 0 : i32
    %c0_i32_0 = arith.constant 0 : i32
    return %arg0, %c0_i32 : i32, i32
  }
}

</mosaic_0001>

<llo_original>
// kernel: tpu_custom_call.1
$region0: #{tpu_custom_call.1}
  #allocation0 [shape = 'u32[]', space=smem, size = 0x4, offset = 0x4, fixed_abs, tag = 'smem constant byte address 0x4 - core index']
  #allocation1 [shape = 'u32[144,128]{1,0:T(1,128)}', space=vmem, size = 0x12000, scoped, tag = 'internal scratch']
  %s0 = inlined_call_operand.hbm [shape: f32[16,32], index: 0, kind: input, shape index: {}]
  %s1 = inlined_call_operand.vmem [shape: f32[1,32], index: 1, kind: input, shape index: {}]
  %s2 = inlined_call_operand.vmem [shape: f32[1,32], index: 2, kind: input, shape index: {}]
  %s3 = inlined_call_operand.hbm [shape: f32[16,32], index: 3, kind: output, shape index: {}]
  %s4 = sld [smem:[#allocation0]]
  $region26: #{tpu_custom_call.1} parent=0
    _
  %s6 = ssub.s32 1, %s4
  %s7 = scalar_select 0, %s6, %s4
  $region1: #{tpu_custom_call.1} parent=0
    #allocation2 [shape = 'u8[8192]{0}', space=vmem, size = 0x2000, scoped, tag = 'input window, operand 0, single buffered']
    #allocation3 [shape = 's32[1]{0}', space=sflag, size = 0x4, scoped, tag = 'scoped memory for tpu_custom_call.1']
    #allocation4 [shape = 's32[1]{0}', space=sflag, size = 0x4, scoped, tag = 'scoped memory for tpu_custom_call.1']
    #allocation5 [shape = 'u8[8192]{0}', space=vmem, size = 0x2000, scoped, tag = 'output window, operand 0, single buffered']
    %8 = vsyncpa [#allocation3], 0
    %9 = vsyncpa [#allocation4], 0
    // Predicated region
    $region2: #{tpu_custom_call.1} parent=1 // pred_check
      _
    $region3: #{tpu_custom_call.1} parent=1 // pred_check_branch
      %11 = sbr.rel (0) target = $region5
    $region4: #{tpu_custom_call.1} parent=1 // pred_region
      %s13 = ssub.s32 256, 256
      %14 = vsyncadd [#allocation3], %s13
      %s15 = sshll.u32 [#allocation2], 4
      %s16 = int_to_ptr.vmem [resolvable:$true] %s15
      %21 = dma.hbm_to_vmem [thread:$0]  %s0, 256, %s16, [#allocation3], 128, 128, 8
    $region5: #{tpu_custom_call.1} parent=1 // pred_fallthru
      _
    // Predicated region
    $region6: #{tpu_custom_call.1} parent=1 // pred_check
      _
    $region7: #{tpu_custom_call.1} parent=1 // pred_check_branch
      %23 = sbr.rel (0) target = $region9
    $region8: #{tpu_custom_call.1} parent=1 // pred_region
      _
    $region9: #{tpu_custom_call.1} parent=1 // pred_fallthru
      _
    // Predicated region
    $region10: #{tpu_custom_call.1} parent=1 // pred_check
      _
    $region11: #{tpu_custom_call.1} parent=1 // pred_check_branch
      %25 = sbr.rel (0) target = $region13
    $region12: #{tpu_custom_call.1} parent=1 // pred_region
      _
    $region13: #{tpu_custom_call.1} parent=1 // pred_fallthru
      _
    // Predicated region
    $region14: #{tpu_custom_call.1} parent=1 // pred_check
      _
    $region15: #{tpu_custom_call.1} parent=1 // pred_check_branch
      %27 = sbr.rel (0) target = $region17
    $region16: #{tpu_custom_call.1} parent=1 // pred_region
      %28 = dma.done [#allocation3], 256
    $region17: #{tpu_custom_call.1} parent=1 // pred_fallthru
      _
    %v29 = vld [vmem:[#allocation2] sm:$0xff]
    %v30 = vld [vmem:[#allocation2 + $0x8] sm:$0xff]
    %vm31 = vcmask 261120
    %v32 = vsel %vm31, %v29, 0.0
    %33 = vadd.xlane.f32.xlu0 %v32
    %v34 = vpop.xlane.xlu0 %33
    %v35 = vsel %vm31, %v30, 0.0
    %36 = vadd.xlane.f32.xlu0 %v35
    %v37 = vpop.xlane.xlu0 %36
    %v38 = vmul.f32 %v34, 0.03125
    %v39 = vmul.f32 %v37, 0.03125
    %v40 = vsub.f32 %v29, %v38
    %v41 = vsub.f32 %v30, %v39
    %v42 = vmul.f32 %v40, %v40
    %v43 = vmul.f32 %v41, %v41
    %v44 = vsel %vm31, %v42, 0.0
    %45 = vadd.xlane.f32.xlu0 %v44
    %v46 = vpop.xlane.xlu0 %45
    %v47 = vsel %vm31, %v43, 0.0
    %48 = vadd.xlane.f32.xlu0 %v47
    %v49 = vpop.xlane.xlu0 %48
    %v50 = vmul.f32 %v46, 0.032258064
    %v51 = vmul.f32 %v49, 0.032258064
    %v52 = vrsqrt.pop %v50
    %v53 = vmul.f32 %v50, %v52
    %vm54 = vcmp.eq.f32.partialorder %v50, inf
    %v55 = vsel %vm54, %v50, %v53
    %vm56 = vcmp.eq.f32.partialorder %v50, 0.0
    %v57 = vand.u32 %v50, 2147483648
    %v58 = vsel %vm56, %v57, %v55
    %v59 = vrsqrt.pop %v51
    %v60 = vmul.f32 %v51, %v59
    %vm61 = vcmp.eq.f32.partialorder %v51, inf
    %v62 = vsel %vm61, %v51, %v60
    %vm63 = vcmp.eq.f32.partialorder %v51, 0.0
    %v64 = vand.u32 %v51, 2147483648
    %v65 = vsel %vm63, %v64, %v62
    %v66 = vadd.f32 %v58, 1e-06
    %v67 = vadd.f32 %v65, 1e-06
    %v68 = vrcp.pop %v66
    %v69 = vrcp.pop %v67
    %v70 = vmul.f32 %v40, %v68
    %v71 = vmul.f32 %v41, %v69
    %v72 = vld [vmem:[%s1] sm:$0x1]
    %v73 = vld [vmem:[%s2] sm:$0x1]
    %v75 = vlaneseq
    %v76 = vshrl.u32 %v75, 7
    %v77 = vsub.s32 0, %v76
    %v78 = vrot.slane %v72, %v77
    %v80 = vmul.f32 %v70, %v78
    %v81 = vmul.f32 %v71, %v78
    %v83 = vlaneseq
    %v84 = vshrl.u32 %v83, 7
    %v85 = vsub.s32 0, %v84
    %v86 = vrot.slane %v73, %v85
    %v88 = vadd.f32 %v80, %v86
    %v89 = vadd.f32 %v81, %v86
    %90 = vst.msk [vmem:[#allocation5] sm:$0xff] %vm31, %v88
    %91 = vst.msk [vmem:[#allocation5 + $0x8] sm:$0xff] %vm31, %v89
    // Predicated region
    $region18: #{tpu_custom_call.1} parent=1 // pred_check
      _
    $region19: #{tpu_custom_call.1} parent=1 // pred_check_branch
      %93 = sbr.rel (0) target = $region21
    $region20: #{tpu_custom_call.1} parent=1 // pred_region
      %s95 = ssub.s32 256, 256
      %96 = vsyncadd [#allocation4], %s95
      %s97 = sshll.u32 [#allocation5], 4
      %s98 = int_to_ptr.vmem [resolvable:$true] %s97
      %103 = dma.vmem_to_hbm [thread:$0]  %s98, 256, %s3, [#allocation4], 128, 128, 8
    $region21: #{tpu_custom_call.1} parent=1 // pred_fallthru
      _
    // Predicated region
    $region22: #{tpu_custom_call.1} parent=1 // pred_check
      _
    $region23: #{tpu_custom_call.1} parent=1 // pred_check_branch
      %105 = sbr.rel (0) target = $region25
    $region24: #{tpu_custom_call.1} parent=1 // pred_region
      %106 = dma.done [#allocation4], 256
    $region25: #{tpu_custom_call.1} parent=1 // pred_fallthru
      _
    %107 = vsyncpa [#allocation3], 1
    %108 = vsyncpa [#allocation4], 1

</llo_original>
